<compile_context>
chip_gen: v5e
topology: v5e:2x2
jax: 0.10.0
libtpu: 0.0.40
codegen_flags: <defaults>
</compile_context>

<pallas_src>
import math

import jax
import jax.numpy as jnp
from jax import lax
from jax.experimental import pallas as pl
from jax.experimental.pallas import tpu as pltpu

_EPS = 1e-12  # F.normalize default eps


def _round_up(x: int, m: int) -> int:
    return -(-x // m) * m


def _vmem_capacity() -> int:
    """Per-core VMEM capacity; conservative 64 MiB (v7x) fallback."""
    try:
        return int(pltpu.get_tpu_info().vmem_capacity_bytes)
    except Exception:
        return 64 * 1024 * 1024


def _arcmargin_kernel(feat_ref, w_ref, out_ref):
    """feat_ref: (B, D); w_ref: (k, TILE_C, D) pre-normalized; out_ref: (B, TILE_C)."""
    k, tile_c, d = w_ref.shape

    # Normalize the (tiny) feature block in f32.  Recomputed per class tile:
    # negligible next to streaming the weight tile, and safe under megacore
    # grid sharding (no cross-tile scratch init needed).
    f = feat_ref[...].astype(jnp.float32)
    f_norm = jnp.sqrt(jnp.sum(f * f, axis=-1, keepdims=True))
    f_n = (f * (1.0 / jnp.maximum(f_norm, _EPS))).astype(w_ref.dtype)

    # One long-N MXU pass over all k sub-centers of this class tile.
    # (k, TILE_C, D) -> (k*TILE_C, D) is a leading-dim merge (TILE_C % 8 == 0),
    # and the transposed-RHS contraction consumes the weight in stored layout.
    w2 = w_ref[...].reshape(k * tile_c, d)
    scores = lax.dot_general(
        f_n, w2,
        dimension_numbers=(((1,), (1,)), ((), ())),
        preferred_element_type=jnp.float32)              # (B, k*TILE_C)

    # Max over sub-centers via static, lane-aligned slices (TILE_C % 128 == 0).
    best = scores[:, :tile_c]
    for j in range(1, k):
        best = jnp.maximum(best, scores[:, j * tile_c:(j + 1) * tile_c])

    out_ref[...] = best.astype(out_ref.dtype)


def _pick_tile_c(C, D, k, w_itemsize, vmem_cap, max_tile=1024):
    """Class-tile width: multiple of 128, double-buffered weight stream within
    ~40% of VMEM capacity, and (when free) >= 2 tiles for 2-TC chips."""
    c128 = _round_up(C, 128)
    budget = int(0.40 * vmem_cap)                      # double-buffered weight stream
    by_budget = budget // max(1, 2 * k * D * w_itemsize)
    tile = max(128, min(max_tile, (by_budget // 128) * 128))
    tile = min(tile, c128)
    # Split into 2 tiles when it adds no padding: lets v7x's two TensorCores
    # share the work; costs only one extra ~0.35us grid step on v5e/v6e.
    if tile >= c128 and c128 >= 256 and c128 % 256 == 0:
        tile = c128 // 2
    return tile


def prepare_weight(weight, out_features: int, k: int = 3,
                   weight_dtype=None, max_tile_c: int = 1024):
    """One-time (init-time) repack + pre-normalization of the (C*k, D) parameter.

    Returns (w_kcd, tile_c): row-normalized weight in (k, C_pad, D) layout
    (class dim zero-padded to a multiple of the chosen 128-aligned tile), so
    the per-call path is pure matmul + max with no norm pass.  Optionally cast
    to bf16 to halve HBM traffic (kernel is HBM-bandwidth bound).
    """
    C = out_features
    D = weight.shape[1]
    assert weight.shape == (C * k, D)

    w = weight.astype(jnp.float32)
    norm = jnp.sqrt(jnp.sum(w * w, axis=-1, keepdims=True))
    w = w * (1.0 / jnp.maximum(norm, _EPS))                 # F.normalize in f32
    w = jnp.transpose(w.reshape(C, k, D), (1, 0, 2))        # (k, C, D)
    w = w.astype(weight_dtype if weight_dtype is not None else weight.dtype)

    tile_c = _pick_tile_c(C, D, k, w.dtype.itemsize, _vmem_capacity(),
                          max_tile=max_tile_c)
    c_pad = _round_up(C, tile_c)
    if c_pad != C:
        w = jnp.pad(w, ((0, 0), (0, c_pad - C), (0, 0)))    # zero rows -> cos = 0
    return w, tile_c


def arc_margin_product_subcenter(features, w_kcd, out_features: int, tile_c: int):
    """features: (B, D); w_kcd: (k, C_pad, D) from prepare_weight."""
    B, D = features.shape
    k, c_pad, d_w = w_kcd.shape
    assert d_w == D and c_pad % tile_c == 0 and c_pad >= out_features
    n_c = c_pad // tile_c

    # VMEM budget: double-buffered weight/feature/output tiles + f32 in-kernel
    # temporaries + margin, capped at 75% of per-core VMEM capacity.
    vmem_cap = _vmem_capacity()
    w_tile_bytes = k * tile_c * D * w_kcd.dtype.itemsize
    out_tile_bytes = B * tile_c * 4
    feat_bytes = B * D * features.dtype.itemsize
    temps = B * k * tile_c * 4 + B * D * 4
    need = 2 * w_tile_bytes + 2 * out_tile_bytes + 2 * feat_bytes + temps + (4 << 20)
    vmem_limit = int(min(max(need, 16 << 20), int(0.75 * vmem_cap)))

    out = pl.pallas_call(
        _arcmargin_kernel,
        out_shape=jax.ShapeDtypeStruct((B, c_pad), jnp.float32),
        grid_spec=pltpu.PrefetchScalarGridSpec(
            num_scalar_prefetch=0,
            grid=(n_c,),
            in_specs=[
                # Features: block index never changes -> fetched once, resident.
                pl.BlockSpec((B, D), lambda c: (0, 0)),
                # Weight: streamed (double-buffered) over the class dimension.
                pl.BlockSpec((k, tile_c, D), lambda c: (0, c, 0)),
            ],
            out_specs=pl.BlockSpec((B, tile_c), lambda c: (0, c)),
        ),
        compiler_params=pltpu.CompilerParams(
            dimension_semantics=("parallel",),
            vmem_limit_bytes=vmem_limit,
        ),
    )(features, w_kcd)

    if c_pad != out_features:
        out = out[:, :out_features]
    return out


def _reference(features, weight, out_features, k):
    f = features / jnp.maximum(
        jnp.linalg.norm(features, axis=-1, keepdims=True), _EPS)
    w = weight / jnp.maximum(
        jnp.linalg.norm(weight, axis=-1, keepdims=True), _EPS)
    cos_all = (f @ w.T).reshape(-1, out_features, k)
    return jnp.max(cos_all, axis=2)


if __name__ == "__main__":
    def run_case(B, D, C, k, weight_dtype=None, atol=1e-5, rtol=1e-5):
        key = jax.random.PRNGKey(0)
        k_feat, k_w = jax.random.split(key)
        features = jax.random.normal(k_feat, (B, D), dtype=jnp.float32)
        # Deterministic init matching nn.Parameter + uniform_(-stdv, stdv).
        stdv = 1.0 / math.sqrt(D)
        weight = jax.random.uniform(
            k_w, (C * k, D), minval=-stdv, maxval=stdv, dtype=jnp.float32)

        w_kcd, tile_c = prepare_weight(weight, C, k, weight_dtype=weight_dtype)
        out = arc_margin_product_subcenter(features, w_kcd, C, tile_c)
        out = jax.block_until_ready(out)

        ref = _reference(features, weight, C, k)
        assert out.shape == (B, C)
        err = float(jnp.max(jnp.abs(out - ref)))
        assert jnp.allclose(out, ref, atol=atol, rtol=rtol), (
            f"max abs err {err}")

    # Small shape from the module spec: classes padded to one 128-wide tile.
    run_case(B=8, D=32, C=16, k=3)
    # Non-multiple-of-128 class count (padded), bf16 weight storage path.
    run_case(B=8, D=256, C=300, k=3, weight_dtype=jnp.bfloat16, atol=2e-2, rtol=0)
    # Multi-tile path (class axis split into 2 tiles for 2-TC chips).
    run_case(B=8, D=128, C=1024, k=3)

    print("KERNEL_OK")
</pallas_src>

<mosaic_0001>
module attributes {stable_mosaic.version = 11 : i64} {
  func.func @_arcmargin_kernel(%arg0: i32, %arg1: memref<8x32xf32, #tpu.memory_space<vmem>>, %arg2: memref<3x128x32xf32, #tpu.memory_space<vmem>>, %arg3: memref<8x128xf32, #tpu.memory_space<vmem>>) attributes {dimension_semantics = [#tpu.dimension_semantics<parallel>], iteration_bounds = array<i64: 1>, scalar_prefetch = 0 : i64, scratch_operands = 0 : i64, tpu.core_type = #tpu.core_type<tc>, window_params = [{pipeline_mode = #tpu.pipeline_mode<synchronous>, transform_indices = @transform_0, window_bounds = array<i64: 8, 32>}, {transform_indices = @transform_1, window_bounds = array<i64: 3, 128, 32>}, {transform_indices = @transform_2, window_bounds = array<i64: 8, 128>}]} {
    %c0 = arith.constant 0 : index
    %c0_0 = arith.constant 0 : index
    %0 = vector.load %arg1[%c0, %c0_0] : memref<8x32xf32, #tpu.memory_space<vmem>>, vector<8x32xf32>
    %1 = arith.mulf %0, %0 : vector<8x32xf32>
    %cst = arith.constant dense<0.000000e+00> : vector<8xf32>
    %2 = vector.multi_reduction <add>, %1, %cst [1] : vector<8x32xf32> to vector<8xf32>
    %3 = vector.shape_cast %2 : vector<8xf32> to vector<8x1xf32>
    %4 = math.sqrt %3 : vector<8x1xf32>
    %cst_1 = arith.constant 9.99999996E-13 : f32
    %5 = vector.broadcast %cst_1 : f32 to vector<8x1xf32>
    %6 = arith.maximumf %4, %5 : vector<8x1xf32>
    %cst_2 = arith.constant 1.000000e+00 : f32
    %7 = vector.broadcast %cst_2 : f32 to vector<8x1xf32>
    %8 = arith.divf %7, %6 : vector<8x1xf32>
    %9 = vector.broadcast %8 : vector<8x1xf32> to vector<8x32xf32>
    %10 = arith.mulf %0, %9 : vector<8x32xf32>
    %c0_3 = arith.constant 0 : index
    %c0_4 = arith.constant 0 : index
    %c0_5 = arith.constant 0 : index
    %11 = vector.load %arg2[%c0_3, %c0_4, %c0_5] : memref<3x128x32xf32, #tpu.memory_space<vmem>>, vector<3x128x32xf32>
    %12 = vector.shape_cast %11 : vector<3x128x32xf32> to vector<384x32xf32>
    %cst_6 = arith.constant dense<0.000000e+00> : vector<8x384xf32>
    %13 = tpu.matmul %10, %12, %cst_6 {dimension_numbers = #tpu.dot_dimension_numbers<[1], [1], [0], [0], [0, 0, 1, 0], [], []>} : vector<8x32xf32>, vector<384x32xf32>, vector<8x384xf32> -> vector<8x384xf32>
    %14 = vector.extract_strided_slice %13 {offsets = [0, 0], sizes = [8, 128], strides = [1, 1]} : vector<8x384xf32> to vector<8x128xf32>
    %15 = vector.extract_strided_slice %13 {offsets = [0, 128], sizes = [8, 128], strides = [1, 1]} : vector<8x384xf32> to vector<8x128xf32>
    %16 = arith.maximumf %14, %15 : vector<8x128xf32>
    %17 = vector.extract_strided_slice %13 {offsets = [0, 256], sizes = [8, 128], strides = [1, 1]} : vector<8x384xf32> to vector<8x128xf32>
    %18 = arith.maximumf %16, %17 : vector<8x128xf32>
    %c0_7 = arith.constant 0 : index
    %c0_8 = arith.constant 0 : index
    %19 = vector.load %arg3[%c0_7, %c0_8] : memref<8x128xf32, #tpu.memory_space<vmem>>, vector<8x128xf32>
    tpu.vector_store %arg3[%c0_7, %c0_8], %18 {strides = array<i32>} : memref<8x128xf32, #tpu.memory_space<vmem>>, vector<8x128xf32>,
    return
  }
  func.func @transform_0(%arg0: i32) -> (i32, i32) {
    %c0_i32 = arith.constant 0 : i32
    %c0_i32_0 = arith.constant 0 : i32
    %c0_i32_1 = arith.constant 0 : i32
    return %c0_i32, %c0_i32_0 : i32, i32
  }
  func.func @transform_1(%arg0: i32) -> (i32, i32, i32) {
    %c0_i32 = arith.constant 0 : i32
    %c0_i32_0 = arith.constant 0 : i32
    %c0_i32_1 = arith.constant 0 : i32
    return %c0_i32, %arg0, %c0_i32_0 : i32, i32, i32
  }
  func.func @transform_2(%arg0: i32) -> (i32, i32) {
    %c0_i32 = arith.constant 0 : i32
    %c0_i32_0 = arith.constant 0 : i32
    return %c0_i32, %arg0 : i32, i32
  }
}

</mosaic_0001>

<llo_original>
// kernel: tpu_custom_call.1
$region0: #{tpu_custom_call.1}
  #allocation0 [shape = 'u32[]', space=smem, size = 0x4, offset = 0x4, fixed_abs, tag = 'smem constant byte address 0x4 - core index']
  #allocation1 [shape = 'u32[72,128]{1,0:T(1,128)}', space=vmem, size = 0x9000, scoped, tag = 'internal scratch']
  %s0 = inlined_call_operand.vmem [shape: f32[8,32], index: 0, kind: input, shape index: {}]
  %s1 = inlined_call_operand.vmem [shape: f32[3,128,32], index: 1, kind: input, shape index: {}]
  %s2 = inlined_call_operand.hbm [shape: f32[8,128], index: 2, kind: output, shape index: {}]
  %s3 = sld [smem:[#allocation0]]
  $region18: #{tpu_custom_call.1} parent=0
    _
  %s5 = ssub.s32 1, %s3
  %s6 = scalar_select 0, %s5, %s3
  $region1: #{tpu_custom_call.1} parent=0
    #allocation2 [shape = 'u8[4096]{0}', space=vmem, size = 0x1000, scoped, tag = 'output window, operand 0, single buffered']
    #allocation3 [shape = 's32[1]{0}', space=sflag, size = 0x4, scoped, tag = 'scoped memory for tpu_custom_call.1']
    %7 = vsyncpa [#allocation3], 0
    // Predicated region
    $region2: #{tpu_custom_call.1} parent=1 // pred_check
      _
    $region3: #{tpu_custom_call.1} parent=1 // pred_check_branch
      %9 = sbr.rel (0) target = $region5
    $region4: #{tpu_custom_call.1} parent=1 // pred_region
      _
    $region5: #{tpu_custom_call.1} parent=1 // pred_fallthru
      _
    // Predicated region
    $region6: #{tpu_custom_call.1} parent=1 // pred_check
      _
    $region7: #{tpu_custom_call.1} parent=1 // pred_check_branch
      %11 = sbr.rel (0) target = $region9
    $region8: #{tpu_custom_call.1} parent=1 // pred_region
      _
    $region9: #{tpu_custom_call.1} parent=1 // pred_fallthru
      _
    %v12 = vld [vmem:[%s0] sm:$0xff]
    %v13 = vmul.f32 %v12, %v12
    %vm14 = vcmask 261120
    %v15 = vsel %vm14, %v13, 0.0
    %16 = vadd.xlane.f32.xlu0 %v15
    %v17 = vpop.xlane.xlu0 %16
    %v18 = vrsqrt.pop %v17
    %v19 = vmul.f32 %v18, %v17
    %v20 = vmul.f32 %v19, %v18
    %v21 = vmul.f32 0.5, %v20
    %v22 = vsub.f32 1.5, %v21
    %v23 = vmul.f32 %v18, %v22
    %v24 = vmul.f32 %v17, %v23
    %vm25 = vcmp.eq.f32.partialorder %v17, inf
    %v26 = vsel %vm25, %v17, %v24
    %vm27 = vcmp.eq.f32.partialorder %v17, 0.0
    %v28 = vand.u32 %v17, 2147483648
    %v29 = vsel %vm27, %v28, %v26
    %v30 = vmax.f32 %v29, 1e-12
    %v31 = vrcp.pop %v30
    %v32 = vmul.f32 %v30, %v31
    %v33 = vsub.f32 1.0, %v32
    %v34 = vmul.f32 %v31, %v33
    %v35 = vadd.f32 %v31, %v34
    %vm36 = vweird.f32 %v30
    %vm37 = vweird.f32 %v31
    %vm38 = vmor %vm36, %vm37
    %v39 = vsel %vm38, %v31, %v35
    %v40 = vand.u32 2147483647, %v30
    %vm41 = vcmp.eq.f32.partialorder %v40, 8.507059e+37
    %v42 = vand.u32 %v30, 2147483648
    %v43 = vor.u32 1.1754944e-38, %v42
    %v44 = vsel %vm41, %v43, %v39
    %v45 = vmul.f32 1.0, %v44
    %v46 = vmul.f32 %v12, %v45
    %v47 = vld [vmem:[%s1] sm:$0xff]
    %v48 = vld [vmem:[%s1 + $0x8] sm:$0xff]
    %v49 = vld [vmem:[%s1 + $0x10] sm:$0xff]
    %v50 = vld [vmem:[%s1 + $0x18] sm:$0xff]
    %v51 = vld [vmem:[%s1 + $0x20] sm:$0xff]
    %v52 = vld [vmem:[%s1 + $0x28] sm:$0xff]
    %v53 = vld [vmem:[%s1 + $0x30] sm:$0xff]
    %v54 = vld [vmem:[%s1 + $0x38] sm:$0xff]
    %v55 = vld [vmem:[%s1 + $0x40] sm:$0xff]
    %v56 = vld [vmem:[%s1 + $0x48] sm:$0xff]
    %v57 = vld [vmem:[%s1 + $0x50] sm:$0xff]
    %v58 = vld [vmem:[%s1 + $0x58] sm:$0xff]
    %v59 = vld [vmem:[%s1 + $0x60] sm:$0xff]
    %v60 = vld [vmem:[%s1 + $0x68] sm:$0xff]
    %v61 = vld [vmem:[%s1 + $0x70] sm:$0xff]
    %v62 = vld [vmem:[%s1 + $0x78] sm:$0xff]
    %v63 = vld [vmem:[%s1 + $0x80] sm:$0xff]
    %v64 = vld [vmem:[%s1 + $0x88] sm:$0xff]
    %v65 = vld [vmem:[%s1 + $0x90] sm:$0xff]
    %v66 = vld [vmem:[%s1 + $0x98] sm:$0xff]
    %v67 = vld [vmem:[%s1 + $0xa0] sm:$0xff]
    %v68 = vld [vmem:[%s1 + $0xa8] sm:$0xff]
    %v69 = vld [vmem:[%s1 + $0xb0] sm:$0xff]
    %v70 = vld [vmem:[%s1 + $0xb8] sm:$0xff]
    %v71 = vld [vmem:[%s1 + $0xc0] sm:$0xff]
    %v72 = vld [vmem:[%s1 + $0xc8] sm:$0xff]
    %v73 = vld [vmem:[%s1 + $0xd0] sm:$0xff]
    %v74 = vld [vmem:[%s1 + $0xd8] sm:$0xff]
    %v75 = vld [vmem:[%s1 + $0xe0] sm:$0xff]
    %v76 = vld [vmem:[%s1 + $0xe8] sm:$0xff]
    %v77 = vld [vmem:[%s1 + $0xf0] sm:$0xff]
    %v78 = vld [vmem:[%s1 + $0xf8] sm:$0xff]
    %v79 = vld [vmem:[%s1 + $0x100] sm:$0xff]
    %v80 = vld [vmem:[%s1 + $0x108] sm:$0xff]
    %v81 = vld [vmem:[%s1 + $0x110] sm:$0xff]
    %v82 = vld [vmem:[%s1 + $0x118] sm:$0xff]
    %v83 = vld [vmem:[%s1 + $0x120] sm:$0xff]
    %v84 = vld [vmem:[%s1 + $0x128] sm:$0xff]
    %v85 = vld [vmem:[%s1 + $0x130] sm:$0xff]
    %v86 = vld [vmem:[%s1 + $0x138] sm:$0xff]
    %v87 = vld [vmem:[%s1 + $0x140] sm:$0xff]
    %v88 = vld [vmem:[%s1 + $0x148] sm:$0xff]
    %v89 = vld [vmem:[%s1 + $0x150] sm:$0xff]
    %v90 = vld [vmem:[%s1 + $0x158] sm:$0xff]
    %v91 = vld [vmem:[%s1 + $0x160] sm:$0xff]
    %v92 = vld [vmem:[%s1 + $0x168] sm:$0xff]
    %v93 = vld [vmem:[%s1 + $0x170] sm:$0xff]
    %v94 = vld [vmem:[%s1 + $0x178] sm:$0xff]
    %v96 = vsel %vm14, %v46, 0
    %v99 = vsel %vm14, %v47, 0
    %v102 = vsel %vm14, %v48, 0
    %v105 = vsel %vm14, %v49, 0
    %v108 = vsel %vm14, %v50, 0
    %v111 = vsel %vm14, %v51, 0
    %v114 = vsel %vm14, %v52, 0
    %v117 = vsel %vm14, %v53, 0
    %v120 = vsel %vm14, %v54, 0
    %v123 = vsel %vm14, %v55, 0
    %v126 = vsel %vm14, %v56, 0
    %v129 = vsel %vm14, %v57, 0
    %v132 = vsel %vm14, %v58, 0
    %v135 = vsel %vm14, %v59, 0
    %v138 = vsel %vm14, %v60, 0
    %v141 = vsel %vm14, %v61, 0
    %v144 = vsel %vm14, %v62, 0
    %v147 = vsel %vm14, %v63, 0
    %v150 = vsel %vm14, %v64, 0
    %v153 = vsel %vm14, %v65, 0
    %v156 = vsel %vm14, %v66, 0
    %v159 = vsel %vm14, %v67, 0
    %v162 = vsel %vm14, %v68, 0
    %v165 = vsel %vm14, %v69, 0
    %v168 = vsel %vm14, %v70, 0
    %v171 = vsel %vm14, %v71, 0
    %v174 = vsel %vm14, %v72, 0
    %v177 = vsel %vm14, %v73, 0
    %v180 = vsel %vm14, %v74, 0
    %v183 = vsel %vm14, %v75, 0
    %v186 = vsel %vm14, %v76, 0
    %v189 = vsel %vm14, %v77, 0
    %v192 = vsel %vm14, %v78, 0
    %v195 = vsel %vm14, %v79, 0
    %v198 = vsel %vm14, %v80, 0
    %v201 = vsel %vm14, %v81, 0
    %v204 = vsel %vm14, %v82, 0
    %v207 = vsel %vm14, %v83, 0
    %v210 = vsel %vm14, %v84, 0
    %v213 = vsel %vm14, %v85, 0
    %v216 = vsel %vm14, %v86, 0
    %v219 = vsel %vm14, %v87, 0
    %v222 = vsel %vm14, %v88, 0
    %v225 = vsel %vm14, %v89, 0
    %v228 = vsel %vm14, %v90, 0
    %v231 = vsel %vm14, %v91, 0
    %v234 = vsel %vm14, %v92, 0
    %v237 = vsel %vm14, %v93, 0
    %v240 = vsel %vm14, %v94, 0
    %242 = vmatpush.xpose.msra.mxu0 %v144
    %243 = vmatpush.xpose.msra.mxu0 %v141
    %244 = vmatpush.xpose.msra.mxu0 %v138
    %245 = vmatpush.xpose.msra.mxu0 %v135
    %246 = vmatpush.xpose.msra.mxu0 %v132
    %247 = vmatpush.xpose.msra.mxu0 %v129
    %248 = vmatpush.xpose.msra.mxu0 %v126
    %249 = vmatpush.xpose.msra.mxu0 %v123
    %250 = vmatpush.xpose.msra.mxu0 %v120
    %251 = vmatpush.xpose.msra.mxu0 %v117
    %252 = vmatpush.xpose.msra.mxu0 %v114
    %253 = vmatpush.xpose.msra.mxu0 %v111
    %254 = vmatpush.xpose.msra.mxu0 %v108
    %255 = vmatpush.xpose.msra.mxu0 %v105
    %256 = vmatpush.xpose.msra.mxu0 %v102
    %257 = vmatpush.xpose.msra.mxu0 %v99
    %258 = vmatmul.f32.gmra.mxu0 %v96
    %v259 = vpop.f32.mrf.mxu0
    %v260 = vadd.f32 0.0, %v259
    %261 = vdwg.mxu0
    %262 = vmatpush.xpose.msra.mxu0 %v192
    %263 = vmatpush.xpose.msra.mxu0 %v189
    %264 = vmatpush.xpose.msra.mxu0 %v186
    %265 = vmatpush.xpose.msra.mxu0 %v183
    %266 = vmatpush.xpose.msra.mxu0 %v180
    %267 = vmatpush.xpose.msra.mxu0 %v177
    %268 = vmatpush.xpose.msra.mxu0 %v174
    %269 = vmatpush.xpose.msra.mxu0 %v171
    %270 = vmatpush.xpose.msra.mxu0 %v168
    %271 = vmatpush.xpose.msra.mxu0 %v165
    %272 = vmatpush.xpose.msra.mxu0 %v162
    %273 = vmatpush.xpose.msra.mxu0 %v159
    %274 = vmatpush.xpose.msra.mxu0 %v156
    %275 = vmatpush.xpose.msra.mxu0 %v153
    %276 = vmatpush.xpose.msra.mxu0 %v150
    %277 = vmatpush.xpose.msra.mxu0 %v147
    %278 = vmatmul.f32.gmra.mxu0 %v96
    %v279 = vpop.f32.mrf.mxu0
    %v280 = vadd.f32 0.0, %v279
    %281 = vdwg.mxu0
    %282 = vmatpush.xpose.msra.mxu0 %v240
    %283 = vmatpush.xpose.msra.mxu0 %v237
    %284 = vmatpush.xpose.msra.mxu0 %v234
    %285 = vmatpush.xpose.msra.mxu0 %v231
    %286 = vmatpush.xpose.msra.mxu0 %v228
    %287 = vmatpush.xpose.msra.mxu0 %v225
    %288 = vmatpush.xpose.msra.mxu0 %v222
    %289 = vmatpush.xpose.msra.mxu0 %v219
    %290 = vmatpush.xpose.msra.mxu0 %v216
    %291 = vmatpush.xpose.msra.mxu0 %v213
    %292 = vmatpush.xpose.msra.mxu0 %v210
    %293 = vmatpush.xpose.msra.mxu0 %v207
    %294 = vmatpush.xpose.msra.mxu0 %v204
    %295 = vmatpush.xpose.msra.mxu0 %v201
    %296 = vmatpush.xpose.msra.mxu0 %v198
    %297 = vmatpush.xpose.msra.mxu0 %v195
    %298 = vmatmul.f32.gmra.mxu0 %v96
    %v299 = vpop.f32.mrf.mxu0
    %v300 = vadd.f32 0.0, %v299
    %301 = vdwg.mxu0
    %v302 = vmax.f32 %v260, %v280
    %v303 = vmax.f32 %v302, %v300
    %304 = vst [vmem:[#allocation2] sm:$0xff] %v303
    // Predicated region
    $region10: #{tpu_custom_call.1} parent=1 // pred_check
      _
    $region11: #{tpu_custom_call.1} parent=1 // pred_check_branch
      %306 = sbr.rel (0) target = $region13
    $region12: #{tpu_custom_call.1} parent=1 // pred_region
      %308 = vsyncadd [#allocation3], 0
      %s310 = sshll.u32 [#allocation2], 4
      %s311 = int_to_ptr.vmem [resolvable:$true] %s310
      %s312 = sshll.u32 %s2, 4
      %s313 = int_to_ptr.hbm [resolvable:$true] %s312
      %315 = dma.vmem_to_hbm [thread:$0]  %s311, 128, %s313, [#allocation3]
    $region13: #{tpu_custom_call.1} parent=1 // pred_fallthru
      _
    // Predicated region
    $region14: #{tpu_custom_call.1} parent=1 // pred_check
      _
    $region15: #{tpu_custom_call.1} parent=1 // pred_check_branch
      %317 = sbr.rel (0) target = $region17
    $region16: #{tpu_custom_call.1} parent=1 // pred_region
      %319 = dma.done [#allocation3], 128
    $region17: #{tpu_custom_call.1} parent=1 // pred_fallthru
      _
    %320 = vsyncpa [#allocation3], 1

</llo_original>
